<compile_context>
chip_gen: v6e
topology: v6e:2x2x1
jax: 0.10.0
libtpu: 0.0.40
codegen_flags: <defaults>
</compile_context>

<pallas_src>
import functools

import jax
import jax.numpy as jnp
from jax import lax
from jax.experimental import pallas as pl
from jax.experimental.pallas import tpu as pltpu

NEG_SLOPE = 0.1  # block default: torch.nn.LeakyReLU(negative_slope=0.1)


def _bottleneck_kernel(x_ref, w1p_ref, w2_ref, w3_ref, mask_ref, o_ref,
                       patches_ref, *, C, W_img, neg_slope, use_projection,
                       mxu_dtype):
    """One batch-fold block.
    x_ref   : (1, Cin, L)   L = images_per_block * H*W (lane axis)
    w1p_ref : (C+4C, Cin)   conv1 weight stacked on top of projection weight
    w2_ref  : (C, 9*C)      conv2 weight in im2col (tap-major) column order
    w3_ref  : (4C, C)
    mask_ref: (9, L) f32    precomputed zero-pad border mask, one row per tap
    o_ref   : (1, 4C, L)
    patches_ref : VMEM scratch (9*C, L) holding the im2col slab
    """

    def leaky(v):  # negative_slope < 1  =>  leaky_relu(v) == max(v, s*v)
        return jnp.maximum(v, neg_slope * v)

    x = x_ref[0]                                               # (Cin, L)
    L = x.shape[1]

    # conv1 + skip projection as ONE MXU contraction over x:
    #   (5C, Cin) @ (Cin, L): first C rows -> conv1, last 4C rows -> skip.
    y1xs = jnp.dot(w1p_ref[...], x.astype(mxu_dtype),
                   preferred_element_type=jnp.float32)
    y1 = leaky(y1xs[:C])                                       # (C, L) f32
    xs = y1xs[C:] if use_projection else x                     # (4C, L) f32

    # conv2 (3x3, pad=1, stride=1) as a single im2col matmul.  Each tap is a
    # lane roll of y1 (XLU slot) times its precomputed border-mask row (one
    # VPU vmul), staged straight into the VMEM scratch slab so at most one
    # tap is live in vregs at a time.
    for t in range(9):
        dh, dw = t // 3 - 1, t % 3 - 1
        off = dh * W_img + dw
        if off == 0:
            tap = y1                                           # center tap
        else:
            shifted = pltpu.roll(y1, shift=(-off) % L, axis=1)
            tap = shifted * mask_ref[pl.ds(t, 1), :]           # (1,L) bcast
        patches_ref[pl.ds(t * C, C), :] = tap.astype(patches_ref.dtype)

    y2 = leaky(jnp.dot(w2_ref[...], patches_ref[...],          # (C, L)
                       preferred_element_type=jnp.float32))

    # conv3: 1x1 -> (4C, L)
    y3 = leaky(jnp.dot(w3_ref[...], y2.astype(mxu_dtype),
                       preferred_element_type=jnp.float32))

    o_ref[0] = leaky(y3 + xs).astype(o_ref.dtype)


def resnet_bottleneck_block(x_nchw, w1, w2, w3, w_proj, *,
                            negative_slope=NEG_SLOPE,
                            mxu_dtype=jnp.float32,
                            num_blocks=None):
    """Matches ResNetBottleneckBlock.forward (stride=1, no norm, no DW-sep).

    x_nchw : (N, Cin, H, W) f32
    w1     : (C,  Cin, 1, 1)   conv1 weight (PyTorch OIHW)
    w2     : (C,  C,   3, 3)   conv2 weight
    w3     : (4C, C,   1, 1)   conv3 weight
    w_proj : (4C, Cin, 1, 1)   projection weight
    returns: (N, 4C, H, W) f32
    """
    N, Cin, H, W = x_nchw.shape
    C = w1.shape[0]
    C4 = w3.shape[0]
    HW = H * W

    # Projection trigger matches the PyTorch forward: with stride=1 the
    # spatial dims are unchanged, so projection iff conv2 channels (C) != Cin.
    use_projection = (Cin != C)
    if not use_projection:
        assert Cin == C4, "identity skip requires in_channels == 4*out_channels"

    # Batch folding / grid choice:
    #  * fold images into the lane axis per block (fewer ~0.35us grid steps,
    #    wider lane-dense matmuls -> main lever on single-TC v5e/v6e)
    #  * default grid length 2 when possible so both v7x TensorCores work
    #    under dimension_semantics=("parallel",).  Pass num_blocks=1 to fold
    #    everything into one step on v5e/v6e.
    if num_blocks is None:
        num_blocks = 2 if (N >= 2 and N % 2 == 0) else 1
    assert N % num_blocks == 0, (N, num_blocks)
    ipb = N // num_blocks                      # images per grid block
    L = ipb * HW                               # lane extent per block

    # Layout glue: pure reshapes plus one cheap transpose (trivial when ipb=1).
    x_blocks = x_nchw.reshape(num_blocks, ipb, Cin, HW)
    x_blocks = jnp.transpose(x_blocks, (0, 2, 1, 3)).reshape(num_blocks, Cin, L)

    # Weights to matmul form.  conv1 and the projection are stacked so the
    # kernel does one (5C, Cin) contraction over x.
    w1m = w1.reshape(C, Cin)
    wpm = w_proj.reshape(C4, Cin)
    w1p = jnp.concatenate([w1m, wpm], axis=0) if use_projection else w1m
    # (co, ci, kh, kw) -> (co, (kh*3+kw)*C + ci): column order matches the
    # tap-major stacking of the im2col scratch slab.
    w2m = jnp.transpose(w2, (0, 2, 3, 1)).reshape(C, 9 * C)
    w3m = w3.reshape(C4, C)

    w1p = w1p.astype(mxu_dtype)
    w2m = w2m.astype(mxu_dtype)
    w3m = w3m.astype(mxu_dtype)

    # Precomputed zero-pad border mask: one (1, HW) row per 3x3 tap, tiled per
    # folded image along the lane axis (so pltpu.roll never leaks pixels
    # across image boundaries).
    idx = jnp.arange(HW)
    hh, ww = idx // W, idx % W
    rows = []
    for t in range(9):
        dh, dw = t // 3 - 1, t % 3 - 1
        rows.append((hh + dh >= 0) & (hh + dh < H) &
                    (ww + dw >= 0) & (ww + dw < W))
    mask9 = jnp.tile(jnp.stack(rows).astype(jnp.float32), (1, ipb))   # (9, L)

    kernel = functools.partial(
        _bottleneck_kernel, C=C, W_img=W, neg_slope=negative_slope,
        use_projection=use_projection, mxu_dtype=mxu_dtype)

    out_blocks = pl.pallas_call(
        kernel,
        out_shape=jax.ShapeDtypeStruct((num_blocks, C4, L), x_nchw.dtype),
        grid=(num_blocks,),
        in_specs=[
            pl.BlockSpec((1, Cin, L), lambda n: (n, 0, 0)),
            pl.BlockSpec(w1p.shape, lambda n: (0, 0)),
            pl.BlockSpec((C, 9 * C), lambda n: (0, 0)),
            pl.BlockSpec((C4, C), lambda n: (0, 0)),
            pl.BlockSpec((9, L), lambda n: (0, 0)),
        ],
        out_specs=pl.BlockSpec((1, C4, L), lambda n: (n, 0, 0)),
        scratch_shapes=[pltpu.VMEM((9 * C, L), mxu_dtype)],
        compiler_params=pltpu.CompilerParams(
            dimension_semantics=("parallel",),
            vmem_limit_bytes=32 * 1024 * 1024),
    )(x_blocks, w1p, w2m, w3m, mask9)

    out = out_blocks.reshape(num_blocks, C4, ipb, HW)
    return jnp.transpose(out, (0, 2, 1, 3)).reshape(N, C4, H, W)


def _leaky_ref(v, s=NEG_SLOPE):
    return jnp.where(v >= 0, v, s * v)


def _reference(x, w1, w2, w3, wp):
    """Plain-JAX reference of the PyTorch forward (NCHW, OIHW)."""
    dn = ("NCHW", "OIHW", "NCHW")
    y1 = _leaky_ref(lax.conv_general_dilated(
        x, w1, (1, 1), "VALID", dimension_numbers=dn))
    y2 = _leaky_ref(lax.conv_general_dilated(
        y1, w2, (1, 1), [(1, 1), (1, 1)], dimension_numbers=dn))
    y3 = _leaky_ref(lax.conv_general_dilated(
        y2, w3, (1, 1), "VALID", dimension_numbers=dn))
    xs = lax.conv_general_dilated(
        x, wp, (1, 1), "VALID", dimension_numbers=dn)
    return _leaky_ref(y3 + xs)


if __name__ == "__main__":
    key = jax.random.PRNGKey(0)
    k0, k1, k2, k3, k4 = jax.random.split(key, 5)

    N, Cin, H, W = 2, 4, 16, 16
    C = 8                 # out_channels
    C4 = 4 * C            # block output channels

    x = jax.random.normal(k0, (N, Cin, H, W), dtype=jnp.float32)

    def kaiming_uniform(k, shape):
        # PyTorch Conv2d default init scale (kaiming_uniform, a=sqrt(5)).
        fan_in = shape[1] * shape[2] * shape[3]
        bound = 1.0 / jnp.sqrt(jnp.float32(fan_in))
        return jax.random.uniform(k, shape, jnp.float32, -bound, bound)

    w1 = kaiming_uniform(k1, (C, Cin, 1, 1))
    w2 = kaiming_uniform(k2, (C, C, 3, 3))
    w3 = kaiming_uniform(k3, (C4, C, 1, 1))
    wp = kaiming_uniform(k4, (C4, Cin, 1, 1))

    out = jax.block_until_ready(resnet_bottleneck_block(x, w1, w2, w3, wp))
    assert out.shape == (N, C4, H, W), out.shape

    ref = jax.block_until_ready(_reference(x, w1, w2, w3, wp))
    max_err = float(jnp.max(jnp.abs(out - ref)))
    assert jnp.allclose(out, ref, atol=1e-4, rtol=1e-4), max_err

    print("KERNEL_OK")
</pallas_src>

<mosaic_0001>
module attributes {stable_mosaic.version = 11 : i64} {
  func.func @_bottleneck_kernel(%arg0: i32, %arg1: memref<1x4x256xf32, #tpu.memory_space<vmem>>, %arg2: memref<40x4xf32, #tpu.memory_space<vmem>>, %arg3: memref<8x72xf32, #tpu.memory_space<vmem>>, %arg4: memref<32x8xf32, #tpu.memory_space<vmem>>, %arg5: memref<9x256xf32, #tpu.memory_space<vmem>>, %arg6: memref<1x32x256xf32, #tpu.memory_space<vmem>>, %arg7: memref<72x256xf32, #tpu.memory_space<vmem>>) attributes {dimension_semantics = [#tpu.dimension_semantics<parallel>], iteration_bounds = array<i64: 2>, scalar_prefetch = 0 : i64, scratch_operands = 1 : i64, tpu.core_type = #tpu.core_type<tc>, window_params = [{transform_indices = @transform_0, window_bounds = array<i64: 1, 4, 256>}, {pipeline_mode = #tpu.pipeline_mode<synchronous>, transform_indices = @transform_1, window_bounds = array<i64: 40, 4>}, {pipeline_mode = #tpu.pipeline_mode<synchronous>, transform_indices = @transform_2, window_bounds = array<i64: 8, 72>}, {pipeline_mode = #tpu.pipeline_mode<synchronous>, transform_indices = @transform_3, window_bounds = array<i64: 32, 8>}, {pipeline_mode = #tpu.pipeline_mode<synchronous>, transform_indices = @transform_4, window_bounds = array<i64: 9, 256>}, {transform_indices = @transform_5, window_bounds = array<i64: 1, 32, 256>}]} {
    %c0 = arith.constant 0 : index
    %c0_0 = arith.constant 0 : index
    %c0_1 = arith.constant 0 : index
    %0 = vector.load %arg1[%c0, %c0_0, %c0_1] : memref<1x4x256xf32, #tpu.memory_space<vmem>>, vector<1x4x256xf32>
    %1 = vector.shape_cast %0 : vector<1x4x256xf32> to vector<4x256xf32>
    %c0_2 = arith.constant 0 : index
    %c0_3 = arith.constant 0 : index
    %2 = vector.load %arg2[%c0_2, %c0_3] : memref<40x4xf32, #tpu.memory_space<vmem>>, vector<40x4xf32>
    %cst = arith.constant dense<0.000000e+00> : vector<40x256xf32>
    %3 = tpu.matmul %2, %1, %cst {dimension_numbers = #tpu.dot_dimension_numbers<[1], [0], [0], [1], [0, 0, 1, 1], [], []>} : vector<40x4xf32>, vector<4x256xf32>, vector<40x256xf32> -> vector<40x256xf32>
    %4 = vector.extract_strided_slice %3 {offsets = [0, 0], sizes = [8, 256], strides = [1, 1]} : vector<40x256xf32> to vector<8x256xf32>
    %cst_4 = arith.constant 1.000000e-01 : f32
    %5 = vector.broadcast %cst_4 : f32 to vector<8x256xf32>
    %6 = arith.mulf %5, %4 : vector<8x256xf32>
    %7 = arith.maximumf %4, %6 : vector<8x256xf32>
    %8 = vector.extract_strided_slice %3 {offsets = [8, 0], sizes = [32, 256], strides = [1, 1]} : vector<40x256xf32> to vector<32x256xf32>
    %c17_i32 = arith.constant 17 : i32
    %9 = tpu.dynamic_rotate %7 by %c17_i32 dim 1 : vector<8x256xf32>, i32 -> vector<8x256xf32>
    %c0_5 = arith.constant 0 : index
    %c0_6 = arith.constant 0 : index
    %10 = vector.load %arg5[%c0_5, %c0_6] : memref<9x256xf32, #tpu.memory_space<vmem>>, vector<1x256xf32>
    %11 = vector.broadcast %10 : vector<1x256xf32> to vector<8x256xf32>
    %12 = arith.mulf %9, %11 : vector<8x256xf32>
    %c0_7 = arith.constant 0 : index
    %c0_8 = arith.constant 0 : index
    %13 = vector.load %arg7[%c0_7, %c0_8] : memref<72x256xf32, #tpu.memory_space<vmem>>, vector<8x256xf32>
    tpu.vector_store %arg7[%c0_7, %c0_8], %12 {strides = array<i32>} : memref<72x256xf32, #tpu.memory_space<vmem>>, vector<8x256xf32>,
    %c16_i32 = arith.constant 16 : i32
    %14 = tpu.dynamic_rotate %7 by %c16_i32 dim 1 : vector<8x256xf32>, i32 -> vector<8x256xf32>
    %c1 = arith.constant 1 : index
    %c0_9 = arith.constant 0 : index
    %15 = vector.load %arg5[%c1, %c0_9] : memref<9x256xf32, #tpu.memory_space<vmem>>, vector<1x256xf32>
    %16 = vector.broadcast %15 : vector<1x256xf32> to vector<8x256xf32>
    %17 = arith.mulf %14, %16 : vector<8x256xf32>
    %c8 = arith.constant 8 : index
    %c0_10 = arith.constant 0 : index
    %18 = vector.load %arg7[%c8, %c0_10] : memref<72x256xf32, #tpu.memory_space<vmem>>, vector<8x256xf32>
    tpu.vector_store %arg7[%c8, %c0_10], %17 {strides = array<i32>} : memref<72x256xf32, #tpu.memory_space<vmem>>, vector<8x256xf32>,
    %c15_i32 = arith.constant 15 : i32
    %19 = tpu.dynamic_rotate %7 by %c15_i32 dim 1 : vector<8x256xf32>, i32 -> vector<8x256xf32>
    %c2 = arith.constant 2 : index
    %c0_11 = arith.constant 0 : index
    %20 = vector.load %arg5[%c2, %c0_11] : memref<9x256xf32, #tpu.memory_space<vmem>>, vector<1x256xf32>
    %21 = vector.broadcast %20 : vector<1x256xf32> to vector<8x256xf32>
    %22 = arith.mulf %19, %21 : vector<8x256xf32>
    %c16 = arith.constant 16 : index
    %c0_12 = arith.constant 0 : index
    %23 = vector.load %arg7[%c16, %c0_12] : memref<72x256xf32, #tpu.memory_space<vmem>>, vector<8x256xf32>
    tpu.vector_store %arg7[%c16, %c0_12], %22 {strides = array<i32>} : memref<72x256xf32, #tpu.memory_space<vmem>>, vector<8x256xf32>,
    %c1_i32 = arith.constant 1 : i32
    %24 = tpu.dynamic_rotate %7 by %c1_i32 dim 1 : vector<8x256xf32>, i32 -> vector<8x256xf32>
    %c3 = arith.constant 3 : index
    %c0_13 = arith.constant 0 : index
    %25 = vector.load %arg5[%c3, %c0_13] : memref<9x256xf32, #tpu.memory_space<vmem>>, vector<1x256xf32>
    %26 = vector.broadcast %25 : vector<1x256xf32> to vector<8x256xf32>
    %27 = arith.mulf %24, %26 : vector<8x256xf32>
    %c24 = arith.constant 24 : index
    %c0_14 = arith.constant 0 : index
    %28 = vector.load %arg7[%c24, %c0_14] : memref<72x256xf32, #tpu.memory_space<vmem>>, vector<8x256xf32>
    tpu.vector_store %arg7[%c24, %c0_14], %27 {strides = array<i32>} : memref<72x256xf32, #tpu.memory_space<vmem>>, vector<8x256xf32>,
    %c32 = arith.constant 32 : index
    %c0_15 = arith.constant 0 : index
    %29 = vector.load %arg7[%c32, %c0_15] : memref<72x256xf32, #tpu.memory_space<vmem>>, vector<8x256xf32>
    tpu.vector_store %arg7[%c32, %c0_15], %7 {strides = array<i32>} : memref<72x256xf32, #tpu.memory_space<vmem>>, vector<8x256xf32>,
    %c255_i32 = arith.constant 255 : i32
    %30 = tpu.dynamic_rotate %7 by %c255_i32 dim 1 : vector<8x256xf32>, i32 -> vector<8x256xf32>
    %c5 = arith.constant 5 : index
    %c0_16 = arith.constant 0 : index
    %31 = vector.load %arg5[%c5, %c0_16] : memref<9x256xf32, #tpu.memory_space<vmem>>, vector<1x256xf32>
    %32 = vector.broadcast %31 : vector<1x256xf32> to vector<8x256xf32>
    %33 = arith.mulf %30, %32 : vector<8x256xf32>
    %c40 = arith.constant 40 : index
    %c0_17 = arith.constant 0 : index
    %34 = vector.load %arg7[%c40, %c0_17] : memref<72x256xf32, #tpu.memory_space<vmem>>, vector<8x256xf32>
    tpu.vector_store %arg7[%c40, %c0_17], %33 {strides = array<i32>} : memref<72x256xf32, #tpu.memory_space<vmem>>, vector<8x256xf32>,
    %c241_i32 = arith.constant 241 : i32
    %35 = tpu.dynamic_rotate %7 by %c241_i32 dim 1 : vector<8x256xf32>, i32 -> vector<8x256xf32>
    %c6 = arith.constant 6 : index
    %c0_18 = arith.constant 0 : index
    %36 = vector.load %arg5[%c6, %c0_18] : memref<9x256xf32, #tpu.memory_space<vmem>>, vector<1x256xf32>
    %37 = vector.broadcast %36 : vector<1x256xf32> to vector<8x256xf32>
    %38 = arith.mulf %35, %37 : vector<8x256xf32>
    %c48 = arith.constant 48 : index
    %c0_19 = arith.constant 0 : index
    %39 = vector.load %arg7[%c48, %c0_19] : memref<72x256xf32, #tpu.memory_space<vmem>>, vector<8x256xf32>
    tpu.vector_store %arg7[%c48, %c0_19], %38 {strides = array<i32>} : memref<72x256xf32, #tpu.memory_space<vmem>>, vector<8x256xf32>,
    %c240_i32 = arith.constant 240 : i32
    %40 = tpu.dynamic_rotate %7 by %c240_i32 dim 1 : vector<8x256xf32>, i32 -> vector<8x256xf32>
    %c7 = arith.constant 7 : index
    %c0_20 = arith.constant 0 : index
    %41 = vector.load %arg5[%c7, %c0_20] : memref<9x256xf32, #tpu.memory_space<vmem>>, vector<1x256xf32>
    %42 = vector.broadcast %41 : vector<1x256xf32> to vector<8x256xf32>
    %43 = arith.mulf %40, %42 : vector<8x256xf32>
    %c56 = arith.constant 56 : index
    %c0_21 = arith.constant 0 : index
    %44 = vector.load %arg7[%c56, %c0_21] : memref<72x256xf32, #tpu.memory_space<vmem>>, vector<8x256xf32>
    tpu.vector_store %arg7[%c56, %c0_21], %43 {strides = array<i32>} : memref<72x256xf32, #tpu.memory_space<vmem>>, vector<8x256xf32>,
    %c239_i32 = arith.constant 239 : i32
    %45 = tpu.dynamic_rotate %7 by %c239_i32 dim 1 : vector<8x256xf32>, i32 -> vector<8x256xf32>
    %c8_22 = arith.constant 8 : index
    %c0_23 = arith.constant 0 : index
    %46 = vector.load %arg5[%c8_22, %c0_23] : memref<9x256xf32, #tpu.memory_space<vmem>>, vector<1x256xf32>
    %47 = vector.broadcast %46 : vector<1x256xf32> to vector<8x256xf32>
    %48 = arith.mulf %45, %47 : vector<8x256xf32>
    %c64 = arith.constant 64 : index
    %c0_24 = arith.constant 0 : index
    %49 = vector.load %arg7[%c64, %c0_24] : memref<72x256xf32, #tpu.memory_space<vmem>>, vector<8x256xf32>
    tpu.vector_store %arg7[%c64, %c0_24], %48 {strides = array<i32>} : memref<72x256xf32, #tpu.memory_space<vmem>>, vector<8x256xf32>,
    %c0_25 = arith.constant 0 : index
    %c0_26 = arith.constant 0 : index
    %50 = vector.load %arg3[%c0_25, %c0_26] : memref<8x72xf32, #tpu.memory_space<vmem>>, vector<8x72xf32>
    %c0_27 = arith.constant 0 : index
    %c0_28 = arith.constant 0 : index
    %51 = vector.load %arg7[%c0_27, %c0_28] : memref<72x256xf32, #tpu.memory_space<vmem>>, vector<72x256xf32>
    %cst_29 = arith.constant dense<0.000000e+00> : vector<8x256xf32>
    %52 = tpu.matmul %50, %51, %cst_29 {dimension_numbers = #tpu.dot_dimension_numbers<[1], [0], [0], [1], [0, 0, 1, 1], [], []>} : vector<8x72xf32>, vector<72x256xf32>, vector<8x256xf32> -> vector<8x256xf32>
    %cst_30 = arith.constant 1.000000e-01 : f32
    %53 = vector.broadcast %cst_30 : f32 to vector<8x256xf32>
    %54 = arith.mulf %53, %52 : vector<8x256xf32>
    %55 = arith.maximumf %52, %54 : vector<8x256xf32>
    %c0_31 = arith.constant 0 : index
    %c0_32 = arith.constant 0 : index
    %56 = vector.load %arg4[%c0_31, %c0_32] : memref<32x8xf32, #tpu.memory_space<vmem>>, vector<32x8xf32>
    %cst_33 = arith.constant dense<0.000000e+00> : vector<32x256xf32>
    %57 = tpu.matmul %56, %55, %cst_33 {dimension_numbers = #tpu.dot_dimension_numbers<[1], [0], [0], [1], [0, 0, 1, 1], [], []>} : vector<32x8xf32>, vector<8x256xf32>, vector<32x256xf32> -> vector<32x256xf32>
    %cst_34 = arith.constant 1.000000e-01 : f32
    %58 = vector.broadcast %cst_34 : f32 to vector<32x256xf32>
    %59 = arith.mulf %58, %57 : vector<32x256xf32>
    %60 = arith.maximumf %57, %59 : vector<32x256xf32>
    %61 = arith.addf %60, %8 : vector<32x256xf32>
    %cst_35 = arith.constant 1.000000e-01 : f32
    %62 = vector.broadcast %cst_35 : f32 to vector<32x256xf32>
    %63 = arith.mulf %62, %61 : vector<32x256xf32>
    %64 = arith.maximumf %61, %63 : vector<32x256xf32>
    %c0_36 = arith.constant 0 : index
    %c0_37 = arith.constant 0 : index
    %c0_38 = arith.constant 0 : index
    %65 = vector.load %arg6[%c0_36, %c0_37, %c0_38] : memref<1x32x256xf32, #tpu.memory_space<vmem>>, vector<1x32x256xf32>
    %66 = vector.shape_cast %65 : vector<1x32x256xf32> to vector<32x256xf32>
    %67 = vector.shape_cast %64 : vector<32x256xf32> to vector<1x32x256xf32>
    tpu.vector_store %arg6[%c0_36, %c0_37, %c0_38], %67 {strides = array<i32>} : memref<1x32x256xf32, #tpu.memory_space<vmem>>, vector<1x32x256xf32>,
    return
  }
  func.func @transform_0(%arg0: i32) -> (i32, i32, i32) {
    %c0_i32 = arith.constant 0 : i32
    %c0_i32_0 = arith.constant 0 : i32
    %c0_i32_1 = arith.constant 0 : i32
    return %arg0, %c0_i32, %c0_i32_0 : i32, i32, i32
  }
  func.func @transform_1(%arg0: i32) -> (i32, i32) {
    %c0_i32 = arith.constant 0 : i32
    %c0_i32_0 = arith.constant 0 : i32
    %c0_i32_1 = arith.constant 0 : i32
    return %c0_i32, %c0_i32_0 : i32, i32
  }
  func.func @transform_2(%arg0: i32) -> (i32, i32) {
    %c0_i32 = arith.constant 0 : i32
    %c0_i32_0 = arith.constant 0 : i32
    %c0_i32_1 = arith.constant 0 : i32
    return %c0_i32, %c0_i32_0 : i32, i32
  }
  func.func @transform_3(%arg0: i32) -> (i32, i32) {
    %c0_i32 = arith.constant 0 : i32
    %c0_i32_0 = arith.constant 0 : i32
    %c0_i32_1 = arith.constant 0 : i32
    return %c0_i32, %c0_i32_0 : i32, i32
  }
  func.func @transform_4(%arg0: i32) -> (i32, i32) {
    %c0_i32 = arith.constant 0 : i32
    %c0_i32_0 = arith.constant 0 : i32
    %c0_i32_1 = arith.constant 0 : i32
    return %c0_i32, %c0_i32_0 : i32, i32
  }
  func.func @transform_5(%arg0: i32) -> (i32, i32, i32) {
    %c0_i32 = arith.constant 0 : i32
    %c0_i32_0 = arith.constant 0 : i32
    %c0_i32_1 = arith.constant 0 : i32
    return %arg0, %c0_i32, %c0_i32_0 : i32, i32, i32
  }
}

</mosaic_0001>

<llo_original>
// kernel: tpu_custom_call.1
$region0: #{tpu_custom_call.1}
  #allocation0 [shape = 'u32[]', space=smem, size = 0x4, offset = 0x4, fixed_abs, tag = 'smem constant byte address 0x4 - core index']
  #allocation1 [shape = 'u32[144,128]{1,0:T(1,128)}', space=vmem, size = 0x12000, scoped, tag = 'internal scratch']
  #allocation2 [shape = 'f32[72,256]{1,0:T(8,128)}', space=vmem, size = 0x12000, scoped, tag = 'scratch operand']
  %s0 = inlined_call_operand.vmem [shape: f32[2,4,256], index: 0, kind: input, shape index: {}]
  %s1 = inlined_call_operand.vmem [shape: f32[40,4], index: 1, kind: input, shape index: {}]
  %s2 = inlined_call_operand.vmem [shape: f32[8,72], index: 2, kind: input, shape index: {}]
  %s3 = inlined_call_operand.vmem [shape: f32[32,8], index: 3, kind: input, shape index: {}]
  %s4 = inlined_call_operand.vmem [shape: f32[9,256], index: 4, kind: input, shape index: {}]
  %s5 = inlined_call_operand.hbm [shape: f32[2,32,256], index: 5, kind: output, shape index: {}]
  %s6 = sld [smem:[#allocation0]]
  $region53: #{tpu_custom_call.1} parent=0
    _
  %s8 = ssub.s32 1, %s6
  %s9 = scalar_select 0, %s8, %s6
  $region1: #{tpu_custom_call.1} parent=0
    #allocation3 [shape = 'u8[65536]{0}', space=vmem, size = 0x10000, scoped, tag = 'output window, operand 0']
    #allocation4 [shape = 's32[2]{0}', space=sflag, size = 0x8, scoped, tag = 'scoped memory for tpu_custom_call.1']
    %10 = vsyncpa [#allocation4], 0
    %s11 = scalar_lea.sflag [#allocation4], 1
    %12 = vsyncpa %s11, 0
    loop: start=0, step=1, limit=4
    $region2: #{tpu_custom_call.1} parent=1 // loop_pre_header
      _
    $region3: #{tpu_custom_call.1} parent=1 // loop_header
      %s14 = sphi 0, %s18
      %p15 = scmp.ge.s32.totalorder %s14, 4
      %s24 = sphi 0, %s26
      %s27 = sphi 0, %s24
      %s28 = sphi 0, %s27
      %s44 = sphi 0, %s28
      %s48 = sphi 0, %s48
      %s50 = sphi 0, %s48
      %s51 = sphi 0, %s50
      %s65 = sphi 0, %s51
      %s69 = sphi 0, %s69
      %s71 = sphi 0, %s69
      %s72 = sphi 0, %s71
      %s86 = sphi 0, %s72
      %s90 = sphi 0, %s90
      %s92 = sphi 0, %s90
      %s93 = sphi 0, %s92
      %s107 = sphi 0, %s93
      %s111 = sphi 0, %s111
      %s113 = sphi 0, %s111
      %s114 = sphi 0, %s113
      %s128 = sphi 0, %s114
      %s134 = sphi 0, %s136
      %s137 = sphi 0, %s134
      %s138 = sphi 0, %s137
      %s154 = sphi 0, %s138
    $region4: #{tpu_custom_call.1} parent=1 // loop_header_branch
      %17 = sbr.rel (%p15) target = $region8
    $region5: #{tpu_custom_call.1} parent=1 // loop_body
      %s19 = ssub.s32 %s14, 1
      %s20 = ssub.s32 %s14, 2
      %s21 = sadd.s32 %s14, 1
      %s22 = ssub.s32 %s14, %s21
      %p23 = scmp.eq.s32.totalorder %s22, 0
      %s25 = sadd.s32 %s24, 1
      %s26 = scalar_select %p23, %s24, %s25
      %p29 = pneg %p23
      %p30 = scmp.eq.s32.totalorder %s14, 1
      %p31 = por %p29, %p30
      %p32 = scmp.ne.s32.totalorder %s24, %s27
      %p33 = scmp.eq.s32.totalorder %s14, 0
      %p34 = por %p32, %p33
      %p35 = scmp.ne.s32.totalorder %s24, %s27
      %p36 = scmp.eq.s32.totalorder %s19, 1
      %p37 = por %p35, %p36
      %p38 = scmp.ne.s32.totalorder %s27, %s28
      %p39 = scmp.eq.s32.totalorder %s19, 0
      %p40 = por %p38, %p39
      %p41 = scmp.ne.s32.totalorder %s27, %s28
      %p42 = scmp.eq.s32.totalorder %s20, 1
      %p43 = por %p41, %p42
      %p45 = scmp.ne.s32.totalorder %s28, %s44
      %p46 = scmp.eq.s32.totalorder %s20, 0
      %p47 = por %p45, %p46
      %s49 = sadd.s32 %s48, 1
      %p52 = scmp.eq.s32.totalorder %s14, 1
      %p53 = scmp.ne.s32.totalorder %s48, %s50
      %p54 = scmp.eq.s32.totalorder %s14, 0
      %p55 = por %p53, %p54
      %p56 = scmp.ne.s32.totalorder %s48, %s50
      %p57 = scmp.eq.s32.totalorder %s19, 1
      %p58 = por %p56, %p57
      %p59 = scmp.ne.s32.totalorder %s50, %s51
      %p60 = scmp.eq.s32.totalorder %s19, 0
      %p61 = por %p59, %p60
      %p62 = scmp.ne.s32.totalorder %s50, %s51
      %p63 = scmp.eq.s32.totalorder %s20, 1
      %p64 = por %p62, %p63
      %p66 = scmp.ne.s32.totalorder %s51, %s65
      %p67 = scmp.eq.s32.totalorder %s20, 0
      %p68 = por %p66, %p67
      %s70 = sadd.s32 %s69, 1
      %p73 = scmp.eq.s32.totalorder %s14, 1
      %p74 = scmp.ne.s32.totalorder %s69, %s71
      %p75 = scmp.eq.s32.totalorder %s14, 0
      %p76 = por %p74, %p75
      %p77 = scmp.ne.s32.totalorder %s69, %s71
      %p78 = scmp.eq.s32.totalorder %s19, 1
      %p79 = por %p77, %p78
      %p80 = scmp.ne.s32.totalorder %s71, %s72
      %p81 = scmp.eq.s32.totalorder %s19, 0
      %p82 = por %p80, %p81
      %p83 = scmp.ne.s32.totalorder %s71, %s72
      %p84 = scmp.eq.s32.totalorder %s20, 1
      %p85 = por %p83, %p84
      %p87 = scmp.ne.s32.totalorder %s72, %s86
      %p88 = scmp.eq.s32.totalorder %s20, 0
      %p89 = por %p87, %p88
      %s91 = sadd.s32 %s90, 1
      %p94 = scmp.eq.s32.totalorder %s14, 1
      %p95 = scmp.ne.s32.totalorder %s90, %s92
      %p96 = scmp.eq.s32.totalorder %s14, 0
      %p97 = por %p95, %p96
      %p98 = scmp.ne.s32.totalorder %s90, %s92
      %p99 = scmp.eq.s32.totalorder %s19, 1
      %p100 = por %p98, %p99
      %p101 = scmp.ne.s32.totalorder %s92, %s93
      %p102 = scmp.eq.s32.totalorder %s19, 0
      %p103 = por %p101, %p102
      %p104 = scmp.ne.s32.totalorder %s92, %s93
      %p105 = scmp.eq.s32.totalorder %s20, 1
      %p106 = por %p104, %p105
      %p108 = scmp.ne.s32.totalorder %s93, %s107
      %p109 = scmp.eq.s32.totalorder %s20, 0
      %p110 = por %p108, %p109
      %s112 = sadd.s32 %s111, 1
      %p115 = scmp.eq.s32.totalorder %s14, 1
      %p116 = scmp.ne.s32.totalorder %s111, %s113
      %p117 = scmp.eq.s32.totalorder %s14, 0
      %p118 = por %p116, %p117
      %p119 = scmp.ne.s32.totalorder %s111, %s113
      %p120 = scmp.eq.s32.totalorder %s19, 1
      %p121 = por %p119, %p120
      %p122 = scmp.ne.s32.totalorder %s113, %s114
      %p123 = scmp.eq.s32.totalorder %s19, 0
      %p124 = por %p122, %p123
      %p125 = scmp.ne.s32.totalorder %s113, %s114
      %p126 = scmp.eq.s32.totalorder %s20, 1
      %p127 = por %p125, %p126
      %p129 = scmp.ne.s32.totalorder %s114, %s128
      %p130 = scmp.eq.s32.totalorder %s20, 0
      %p131 = por %p129, %p130
      %s132 = ssub.s32 %s14, %s21
      %p133 = scmp.eq.s32.totalorder %s132, 0
      %s135 = sadd.s32 %s134, 1
      %s136 = scalar_select %p133, %s134, %s135
      %p139 = pneg %p133
      %p140 = scmp.eq.s32.totalorder %s14, 1
      %p141 = por %p139, %p140
      %p142 = scmp.ne.s32.totalorder %s134, %s137
      %p143 = scmp.eq.s32.totalorder %s14, 0
      %p144 = por %p142, %p143
      %p145 = scmp.ne.s32.totalorder %s134, %s137
      %p146 = scmp.eq.s32.totalorder %s19, 1
      %p147 = por %p145, %p146
      %p148 = scmp.ne.s32.totalorder %s137, %s138
      %p149 = scmp.eq.s32.totalorder %s19, 0
      %p150 = por %p148, %p149
      %p151 = scmp.ne.s32.totalorder %s137, %s138
      %p152 = scmp.eq.s32.totalorder %s20, 1
      %p153 = por %p151, %p152
      %p155 = scmp.ne.s32.totalorder %s138, %s154
      %p156 = scmp.eq.s32.totalorder %s20, 0
      %p157 = por %p155, %p156
      %p158 = scmp.le.s32.totalorder 1, %s14
      %p159 = scmp.lt.s32.totalorder %s14, 3
      %p160 = pnand %p158, %p159
      %p161 = pneg %p160
      // Predicated region
      $region9: #{tpu_custom_call.1} parent=5 // pred_check
        _
      $region10: #{tpu_custom_call.1} parent=5 // pred_check_branch
        %163 = sbr.rel (%p160) target = $region12
      $region11: #{tpu_custom_call.1} parent=5 // pred_region
        %s164 = ssub.s32 %s14, 1
        // Predicated region
        $region13: #{tpu_custom_call.1} parent=11 // pred_check
          %p165 = pneg %p61
        $region14: #{tpu_custom_call.1} parent=11 // pred_check_branch
          %167 = sbr.rel (%p165) target = $region16
        $region15: #{tpu_custom_call.1} parent=11 // pred_region
          _
        $region16: #{tpu_custom_call.1} parent=11 // pred_fallthru
          _
        // Predicated region
        $region17: #{tpu_custom_call.1} parent=11 // pred_check
          %p168 = pneg %p82
        $region18: #{tpu_custom_call.1} parent=11 // pred_check_branch
          %170 = sbr.rel (%p168) target = $region20
        $region19: #{tpu_custom_call.1} parent=11 // pred_region
          _
        $region20: #{tpu_custom_call.1} parent=11 // pred_fallthru
          _
        // Predicated region
        $region21: #{tpu_custom_call.1} parent=11 // pred_check
          %p171 = pneg %p103
        $region22: #{tpu_custom_call.1} parent=11 // pred_check_branch
          %173 = sbr.rel (%p171) target = $region24
        $region23: #{tpu_custom_call.1} parent=11 // pred_region
          _
        $region24: #{tpu_custom_call.1} parent=11 // pred_fallthru
          _
        // Predicated region
        $region25: #{tpu_custom_call.1} parent=11 // pred_check
          %p174 = pneg %p124
        $region26: #{tpu_custom_call.1} parent=11 // pred_check_branch
          %176 = sbr.rel (%p174) target = $region28
        $region27: #{tpu_custom_call.1} parent=11 // pred_region
          _
        $region28: #{tpu_custom_call.1} parent=11 // pred_fallthru
          _
      $region12: #{tpu_custom_call.1} parent=5 // pred_fallthru
        _
      %p177 = scmp.lt.s32.totalorder %s14, 2
      // Predicated region
      $region29: #{tpu_custom_call.1} parent=5 // pred_check
        %p178 = pneg %p177
      $region30: #{tpu_custom_call.1} parent=5 // pred_check_branch
        %180 = sbr.rel (%p178) target = $region32
      $region31: #{tpu_custom_call.1} parent=5 // pred_region
        // Predicated region
        $region33: #{tpu_custom_call.1} parent=31 // pred_check
          %p181 = pneg %p34
        $region34: #{tpu_custom_call.1} parent=31 // pred_check_branch
          %183 = sbr.rel (%p181) target = $region36
        $region35: #{tpu_custom_call.1} parent=31 // pred_region
          %p184 = scmp.lt.s32.totalorder %s14, 1
          %s185 = scalar_select %p184, %s14, 1
          %s186 = smul.addr %s185, 2
          %s187 = smul.addr %s186, 4
          %s188 = scalar_lea.vmem %s0, %s187
        $region36: #{tpu_custom_call.1} parent=31 // pred_fallthru
          _
      $region32: #{tpu_custom_call.1} parent=5 // pred_fallthru
        _
      %p189 = scmp.le.s32.totalorder 1, %s14
      %p190 = scmp.lt.s32.totalorder %s14, 3
      %p191 = pnand %p189, %p190
      %p192 = pneg %p191
      // Predicated region
      $region37: #{tpu_custom_call.1} parent=5 // pred_check
        _
      $region38: #{tpu_custom_call.1} parent=5 // pred_check_branch
        %194 = sbr.rel (%p191) target = $region40
      $region39: #{tpu_custom_call.1} parent=5 // pred_region
        %s195 = ssub.s32 %s14, 1
        %p196 = scmp.lt.s32.totalorder %s19, 1
        %s197 = scalar_select %p196, %s19, 1
        %s198 = smul.addr %s197, 2
        %s199 = smul.addr %s198, 4
        %s200 = scalar_lea.vmem %s0, %s199
        %p201 = pneg %p40
        %p202 = pneg %p37
        %p203 = pneg %p61
        %p204 = pneg %p58
        %p205 = pneg %p82
        %p206 = pneg %p79
        %p207 = pneg %p103
        %p208 = pneg %p100
        %p209 = pneg %p124
        %p210 = pneg %p121
        %p211 = pneg %p150
        %p212 = pneg %p147
        %s213 = sand.u32 %s137, 1
        %s214 = scalar_lea.sflag [#allocation4], %s213
        %s215 = sand.u32 %s137, 1
        %s216 = smul.addr %s215, 64
        %s217 = scalar_lea.vmem [#allocation3], %s216
        %p218 = scmp.lt.s32.totalorder %s19, 1
        %s219 = scalar_select %p218, %s19, 1
        %s220 = smul.addr %s219, 2
        %s221 = smul.addr %s220, 4
        %s222 = scalar_lea.vmem %s0, %s221
        %v223 = vld [vmem:[%s222] sm:$0xff]
        %v224 = vld [vmem:[%s1] sm:$0xff]
        %v225 = vld [vmem:[%s1 + $0x8] sm:$0xff]
        %v226 = vld [vmem:[%s1 + $0x10] sm:$0xff]
        %v227 = vld [vmem:[%s1 + $0x18] sm:$0xff]
        %v228 = vld [vmem:[%s1 + $0x20] sm:$0xff]
        %v230 = vcombine.high %v223, %v223
        %vm231 = vcmask 31744
        %v233 = vsel %vm231, %v224, 0
        %v236 = vsel %vm231, %v225, 0
        %v239 = vsel %vm231, %v226, 0
        %v242 = vsel %vm231, %v227, 0
        %v245 = vsel %vm231, %v228, 0
        %vm247 = vcmask 1043456
        %v248 = vsel %vm247, %v223, 0
        %v250 = vsel %vm247, %v230, 0
        %252 = vmatprep.subr.mxu0 0.0
        %253 = vmatpush1.msra.mxu0 0.0
        %254 = vmatprep.subr.mxu0 0.0
        %255 = vmatpush1.msra.mxu0 0.0
        %256 = vmatprep.subr.mxu0 0.0
        %257 = vmatpush1.msra.mxu0 0.0
        %258 = vmatprep.subr.mxu0 0.0
        %259 = vmatpush1.msra.mxu0 0.0
        %260 = vmatprep.subr.mxu0 0.0
        %261 = vmatpush1.msra.mxu0 0.0
        %262 = vmatprep.subr.mxu0 0.0
        %263 = vmatpush1.msra.mxu0 0.0
        %264 = vmatprep.subr.mxu0 0.0
        %265 = vmatpush1.msra.mxu0 0.0
        %266 = vmatprep.subr.mxu0 0.0
        %267 = vmatpush1.msra.mxu0 0.0
        %268 = vmatprep.subr.mxu0 0.0
        %269 = vmatpush1.msra.mxu0 0.0
        %270 = vmatprep.subr.mxu0 0.0
        %271 = vmatpush1.msra.mxu0 0.0
        %272 = vmatprep.subr.mxu0 0.0
        %273 = vmatpush1.msra.mxu0 0.0
        %274 = vmatprep.subr.mxu0 0.0
        %275 = vmatpush1.msra.mxu0 0.0
        %276 = vmatprep.subr.mxu0 0.0
        %277 = vmatpush1.msra.mxu0 0.0
        %278 = vmatprep.subr.mxu0 0.0
        %279 = vmatpush1.msra.mxu0 0.0
        %280 = vmatprep.subr.mxu0 0.0
        %281 = vmatpush1.msra.mxu0 0.0
        %282 = vmatprep.subr.mxu0 %v250
        %283 = vmatpush1.msra.mxu0 %v248
        %284 = vmatprep.subr.mxu0 0.0
        %285 = vmatpush2.msra.mxu0 0.0
        %286 = vmatprep.subr.mxu0 0.0
        %287 = vmatpush2.msra.mxu0 0.0
        %288 = vmatprep.subr.mxu0 0.0
        %289 = vmatpush2.msra.mxu0 0.0
        %290 = vmatprep.subr.mxu0 0.0
        %291 = vmatpush2.msra.mxu0 0.0
        %292 = vmatprep.subr.mxu0 0.0
        %293 = vmatpush2.msra.mxu0 0.0
        %294 = vmatprep.subr.mxu0 0.0
        %295 = vmatpush2.msra.mxu0 0.0
        %296 = vmatprep.subr.mxu0 0.0
        %297 = vmatpush2.msra.mxu0 0.0
        %298 = vmatprep.subr.mxu0 0.0
        %299 = vmatpush2.msra.mxu0 0.0
        %300 = vmatprep.subr.mxu0 0.0
        %301 = vmatpush2.msra.mxu0 0.0
        %302 = vmatprep.subr.mxu0 0.0
        %303 = vmatpush2.msra.mxu0 0.0
        %304 = vmatprep.subr.mxu0 0.0
        %305 = vmatpush2.msra.mxu0 0.0
        %306 = vmatprep.subr.mxu0 0.0
        %307 = vmatpush2.msra.mxu0 0.0
        %308 = vmatprep.subr.mxu0 0.0
        %309 = vmatpush2.msra.mxu0 0.0
        %310 = vmatprep.subr.mxu0 0.0
        %311 = vmatpush2.msra.mxu0 0.0
        %312 = vmatprep.subr.mxu0 0.0
        %313 = vmatpush2.msra.mxu0 0.0
        %314 = vmatprep.subr.mxu0 0.0
        %315 = vmatpush2.msra.mxu0 0.0
        %316 = vmatprep.mubr.f32.mxu0 0.0
        %317 = vmatmul.mubr.f32.gmra.mxu0 %v233
        %v318 = vpop.f32.mrf.mxu0
        %v319 = vadd.f32 0.0, %v318
        %v320 = vpop.f32.mrf.mxu0
        %v321 = vadd.f32 0.0, %v320
        %322 = vmatprep.mubr.f32.mxu0 0.0
        %323 = vmatmul.mubr.f32.gmra.mxu0 %v236
        %v324 = vpop.f32.mrf.mxu0
        %v325 = vadd.f32 0.0, %v324
        %v326 = vpop.f32.mrf.mxu0
        %v327 = vadd.f32 0.0, %v326
        %328 = vmatprep.mubr.f32.mxu0 0.0
        %329 = vmatmul.mubr.f32.gmra.mxu0 %v239
        %v330 = vpop.f32.mrf.mxu0
        %v331 = vadd.f32 0.0, %v330
        %v332 = vpop.f32.mrf.mxu0
        %v333 = vadd.f32 0.0, %v332
        %334 = vmatprep.mubr.f32.mxu0 0.0
        %335 = vmatmul.mubr.f32.gmra.mxu0 %v242
        %v336 = vpop.f32.mrf.mxu0
        %v337 = vadd.f32 0.0, %v336
        %v338 = vpop.f32.mrf.mxu0
        %v339 = vadd.f32 0.0, %v338
        %340 = vmatprep.mubr.f32.mxu0 0.0
        %341 = vmatmul.mubr.f32.gmra.mxu0 %v245
        %v342 = vpop.f32.mrf.mxu0
        %v343 = vadd.f32 0.0, %v342
        %v344 = vpop.f32.mrf.mxu0
        %v345 = vadd.f32 0.0, %v344
        %346 = vdwg.mxu0
        %v347 = vmul.f32 %v319, 0.1
        %v348 = vmul.f32 %v321, 0.1
        %v349 = vmax.f32 %v319, %v347
        %v350 = vmax.f32 %v321, %v348
        %351 = vrot.lane.b32.xlu0 %v349, 17
        %v352 = vpop.permute.xlu0 %351
        %353 = vrot.lane.b32.xlu0 %v350, 17
        %v354 = vpop.permute.xlu0 %353
        %v355 = vlaneseq
        %v356 = vand.u32 %v355, 127
        %vm357 = vcmp.lt.s32.totalorder %v356, 17
        %v358 = vsel %vm357, %v352, %v354
        %v359 = vsel %vm357, %v354, %v352
        %v360 = vld [vmem:[%s4] ss:$8 sm:$0x3]
        %v362 = vlaneseq
        %v363 = vshrl.u32 %v362, 7
        %v364 = vsub.s32 0, %v363
        %v365 = vrot.slane %v360, %v364
        %v366 = vlaneseq
        %v367 = vshrl.u32 %v366, 7
        %v368 = vsub.s32 1, %v367
        %v369 = vrot.slane %v360, %v368
        %v372 = vmul.f32 %v359, %v365
        %v373 = vmul.f32 %v358, %v369
        %374 = vst [vmem:[#allocation2] sm:$0xff] %v372
        %375 = vst [vmem:[#allocation2 + $0x8] sm:$0xff] %v373
        %376 = vrot.lane.b32.xlu0 %v349, 16
        %v377 = vpop.permute.xlu0 %376
        %378 = vrot.lane.b32.xlu0 %v350, 16
        %v379 = vpop.permute.xlu0 %378
        %vm380 = vcmp.lt.s32.totalorder %v356, 16
        %v381 = vsel %vm380, %v377, %v379
        %v382 = vsel %vm380, %v379, %v377
        %s383 = scalar_lea.vmem %s4, 1
        %v384 = vld [vmem:[%s383] ss:$8 sm:$0x3]
        %v386 = vlaneseq
        %v387 = vshrl.u32 %v386, 7
        %v388 = vsub.s32 0, %v387
        %v389 = vrot.slane %v384, %v388
        %v390 = vlaneseq
        %v391 = vshrl.u32 %v390, 7
        %v392 = vsub.s32 1, %v391
        %v393 = vrot.slane %v384, %v392
        %v396 = vmul.f32 %v382, %v389
        %v397 = vmul.f32 %v381, %v393
        %398 = vst [vmem:[#allocation2 + $0x10] sm:$0xff] %v396
        %399 = vst [vmem:[#allocation2 + $0x18] sm:$0xff] %v397
        %400 = vrot.lane.b32.xlu0 %v349, 15
        %v401 = vpop.permute.xlu0 %400
        %402 = vrot.lane.b32.xlu0 %v350, 15
        %v403 = vpop.permute.xlu0 %402
        %vm404 = vcmp.lt.s32.totalorder %v356, 15
        %v405 = vsel %vm404, %v401, %v403
        %v406 = vsel %vm404, %v403, %v401
        %s407 = scalar_lea.vmem %s4, 2
        %v408 = vld [vmem:[%s407] ss:$8 sm:$0x3]
        %v410 = vlaneseq
        %v411 = vshrl.u32 %v410, 7
        %v412 = vsub.s32 0, %v411
        %v413 = vrot.slane %v408, %v412
        %v414 = vlaneseq
        %v415 = vshrl.u32 %v414, 7
        %v416 = vsub.s32 1, %v415
        %v417 = vrot.slane %v408, %v416
        %v420 = vmul.f32 %v406, %v413
        %v421 = vmul.f32 %v405, %v417
        %422 = vst [vmem:[#allocation2 + $0x20] sm:$0xff] %v420
        %423 = vst [vmem:[#allocation2 + $0x28] sm:$0xff] %v421
        %424 = vrot.lane.b32.xlu0 %v349, 1
        %v425 = vpop.permute.xlu0 %424
        %426 = vrot.lane.b32.xlu0 %v350, 1
        %v427 = vpop.permute.xlu0 %426
        %vm428 = vcmp.lt.s32.totalorder %v356, 1
        %v429 = vsel %vm428, %v425, %v427
        %v430 = vsel %vm428, %v427, %v425
        %s431 = scalar_lea.vmem %s4, 3
        %v432 = vld [vmem:[%s431] ss:$8 sm:$0x3]
        %v434 = vlaneseq
        %v435 = vshrl.u32 %v434, 7
        %v436 = vsub.s32 0, %v435
        %v437 = vrot.slane %v432, %v436
        %v438 = vlaneseq
        %v439 = vshrl.u32 %v438, 7
        %v440 = vsub.s32 1, %v439
        %v441 = vrot.slane %v432, %v440
        %v444 = vmul.f32 %v430, %v437
        %v445 = vmul.f32 %v429, %v441
        %446 = vst [vmem:[#allocation2 + $0x30] sm:$0xff] %v444
        %447 = vst [vmem:[#allocation2 + $0x38] sm:$0xff] %v445
        %448 = vst [vmem:[#allocation2 + $0x40] sm:$0xff] %v349
        %449 = vst [vmem:[#allocation2 + $0x48] sm:$0xff] %v350
        %450 = vrot.lane.b32.xlu0 %v349, 127
        %v451 = vpop.permute.xlu0 %450
        %452 = vrot.lane.b32.xlu0 %v350, 127
        %v453 = vpop.permute.xlu0 %452
        %vm454 = vcmp.lt.s32.totalorder %v356, 127
        %v455 = vsel %vm454, %v451, %v453
        %v456 = vsel %vm454, %v453, %v451
        %s457 = scalar_lea.vmem %s4, 5
        %v458 = vld [vmem:[%s457] ss:$8 sm:$0x3]
        %v460 = vlaneseq
        %v461 = vshrl.u32 %v460, 7
        %v462 = vsub.s32 0, %v461
        %v463 = vrot.slane %v458, %v462
        %v464 = vlaneseq
        %v465 = vshrl.u32 %v464, 7
        %v466 = vsub.s32 1, %v465
        %v467 = vrot.slane %v458, %v466
        %v470 = vmul.f32 %v455, %v463
        %v471 = vmul.f32 %v456, %v467
        %472 = vst [vmem:[#allocation2 + $0x50] sm:$0xff] %v470
        %473 = vst [vmem:[#allocation2 + $0x58] sm:$0xff] %v471
        %474 = vrot.lane.b32.xlu0 %v349, 113
        %v475 = vpop.permute.xlu0 %474
        %476 = vrot.lane.b32.xlu0 %v350, 113
        %v477 = vpop.permute.xlu0 %476
        %vm478 = vcmp.lt.s32.totalorder %v356, 113
        %v479 = vsel %vm478, %v475, %v477
        %v480 = vsel %vm478, %v477, %v475
        %s481 = scalar_lea.vmem %s4, 6
        %v482 = vld [vmem:[%s481] ss:$8 sm:$0x3]
        %v484 = vlaneseq
        %v485 = vshrl.u32 %v484, 7
        %v486 = vsub.s32 0, %v485
        %v487 = vrot.slane %v482, %v486
        %v488 = vlaneseq
        %v489 = vshrl.u32 %v488, 7
        %v490 = vsub.s32 1, %v489
        %v491 = vrot.slane %v482, %v490
        %v494 = vmul.f32 %v479, %v487
        %v495 = vmul.f32 %v480, %v491
        %496 = vst [vmem:[#allocation2 + $0x60] sm:$0xff] %v494
        %497 = vst [vmem:[#allocation2 + $0x68] sm:$0xff] %v495
        %498 = vrot.lane.b32.xlu0 %v349, 112
        %v499 = vpop.permute.xlu0 %498
        %500 = vrot.lane.b32.xlu0 %v350, 112
        %v501 = vpop.permute.xlu0 %500
        %vm502 = vcmp.lt.s32.totalorder %v356, 112
        %v503 = vsel %vm502, %v499, %v501
        %v504 = vsel %vm502, %v501, %v499
        %s505 = scalar_lea.vmem %s4, 7
        %v506 = vld [vmem:[%s505] ss:$8 sm:$0x3]
        %v508 = vlaneseq
        %v509 = vshrl.u32 %v508, 7
        %v510 = vsub.s32 0, %v509
        %v511 = vrot.slane %v506, %v510
        %v512 = vlaneseq
        %v513 = vshrl.u32 %v512, 7
        %v514 = vsub.s32 1, %v513
        %v515 = vrot.slane %v506, %v514
        %v518 = vmul.f32 %v503, %v511
        %v519 = vmul.f32 %v504, %v515
        %520 = vst [vmem:[#allocation2 + $0x70] sm:$0xff] %v518
        %521 = vst [vmem:[#allocation2 + $0x78] sm:$0xff] %v519
        %522 = vrot.lane.b32.xlu0 %v349, 111
        %v523 = vpop.permute.xlu0 %522
        %524 = vrot.lane.b32.xlu0 %v350, 111
        %v525 = vpop.permute.xlu0 %524
        %vm526 = vcmp.lt.s32.totalorder %v356, 111
        %v527 = vsel %vm526, %v523, %v525
        %v528 = vsel %vm526, %v525, %v523
        %s529 = scalar_lea.vmem %s4, 16
        %v530 = vld [vmem:[%s529] ss:$8 sm:$0x3]
        %v532 = vlaneseq
        %v533 = vshrl.u32 %v532, 7
        %v534 = vsub.s32 0, %v533
        %v535 = vrot.slane %v530, %v534
        %v536 = vlaneseq
        %v537 = vshrl.u32 %v536, 7
        %v538 = vsub.s32 1, %v537
        %v539 = vrot.slane %v530, %v538
        %v542 = vmul.f32 %v527, %v535
        %v543 = vmul.f32 %v528, %v539
        %544 = vst [vmem:[#allocation2 + $0x80] sm:$0xff] %v542
        %545 = vst [vmem:[#allocation2 + $0x88] sm:$0xff] %v543
        %v546 = vld [vmem:[%s2] sm:$0xff]
        %v547 = vld [vmem:[#allocation2] sm:$0xff]
        %v548 = vld [vmem:[#allocation2 + $0x8] sm:$0xff]
        %v549 = vld [vmem:[#allocation2 + $0x10] sm:$0xff]
        %v550 = vld [vmem:[#allocation2 + $0x18] sm:$0xff]
        %v551 = vld [vmem:[#allocation2 + $0x20] sm:$0xff]
        %v552 = vld [vmem:[#allocation2 + $0x28] sm:$0xff]
        %v553 = vld [vmem:[#allocation2 + $0x30] sm:$0xff]
        %v554 = vld [vmem:[#allocation2 + $0x38] sm:$0xff]
        %v555 = vld [vmem:[#allocation2 + $0x40] sm:$0xff]
        %v556 = vld [vmem:[#allocation2 + $0x48] sm:$0xff]
        %v557 = vld [vmem:[#allocation2 + $0x50] sm:$0xff]
        %v558 = vld [vmem:[#allocation2 + $0x58] sm:$0xff]
        %v559 = vld [vmem:[#allocation2 + $0x60] sm:$0xff]
        %v560 = vld [vmem:[#allocation2 + $0x68] sm:$0xff]
        %v561 = vld [vmem:[#allocation2 + $0x70] sm:$0xff]
        %v562 = vld [vmem:[#allocation2 + $0x78] sm:$0xff]
        %v563 = vld [vmem:[#allocation2 + $0x80] sm:$0xff]
        %v564 = vld [vmem:[#allocation2 + $0x88] sm:$0xff]
        %vm565 = vcmask 588800
        %v567 = vsel %vm565, %v546, 0
        %569 = vmatprep.subr.mxu0 0.0
        %570 = vmatpush1.msra.mxu0 0.0
        %571 = vmatprep.subr.mxu0 0.0
        %572 = vmatpush1.msra.mxu0 0.0
        %573 = vmatprep.subr.mxu0 0.0
        %574 = vmatpush1.msra.mxu0 0.0
        %575 = vmatprep.subr.mxu0 0.0
        %576 = vmatpush1.msra.mxu0 0.0
        %577 = vmatprep.subr.mxu0 0.0
        %578 = vmatpush1.msra.mxu0 0.0
        %579 = vmatprep.subr.mxu0 0.0
        %580 = vmatpush1.msra.mxu0 0.0
        %581 = vmatprep.subr.mxu0 0.0
        %582 = vmatpush1.msra.mxu0 0.0
        %583 = vmatprep.subr.mxu0 %v564
        %584 = vmatpush1.msra.mxu0 %v563
        %585 = vmatprep.subr.mxu0 %v562
        %586 = vmatpush1.msra.mxu0 %v561
        %587 = vmatprep.subr.mxu0 %v560
        %588 = vmatpush1.msra.mxu0 %v559
        %589 = vmatprep.subr.mxu0 %v558
        %590 = vmatpush1.msra.mxu0 %v557
        %591 = vmatprep.subr.mxu0 %v556
        %592 = vmatpush1.msra.mxu0 %v555
        %593 = vmatprep.subr.mxu0 %v554
        %594 = vmatpush1.msra.mxu0 %v553
        %595 = vmatprep.subr.mxu0 %v552
        %596 = vmatpush1.msra.mxu0 %v551
        %597 = vmatprep.subr.mxu0 %v550
        %598 = vmatpush1.msra.mxu0 %v549
        %599 = vmatprep.subr.mxu0 %v548
        %600 = vmatpush1.msra.mxu0 %v547
        %601 = vmatprep.subr.mxu0 0.0
        %602 = vmatpush2.msra.mxu0 0.0
        %603 = vmatprep.subr.mxu0 0.0
        %604 = vmatpush2.msra.mxu0 0.0
        %605 = vmatprep.subr.mxu0 0.0
        %606 = vmatpush2.msra.mxu0 0.0
        %607 = vmatprep.subr.mxu0 0.0
        %608 = vmatpush2.msra.mxu0 0.0
        %609 = vmatprep.subr.mxu0 0.0
        %610 = vmatpush2.msra.mxu0 0.0
        %611 = vmatprep.subr.mxu0 0.0
        %612 = vmatpush2.msra.mxu0 0.0
        %613 = vmatprep.subr.mxu0 0.0
        %614 = vmatpush2.msra.mxu0 0.0
        %615 = vmatprep.subr.mxu0 0.0
        %616 = vmatpush2.msra.mxu0 0.0
        %617 = vmatprep.subr.mxu0 0.0
        %618 = vmatpush2.msra.mxu0 0.0
        %619 = vmatprep.subr.mxu0 0.0
        %620 = vmatpush2.msra.mxu0 0.0
        %621 = vmatprep.subr.mxu0 0.0
        %622 = vmatpush2.msra.mxu0 0.0
        %623 = vmatprep.subr.mxu0 0.0
        %624 = vmatpush2.msra.mxu0 0.0
        %625 = vmatprep.subr.mxu0 0.0
        %626 = vmatpush2.msra.mxu0 0.0
        %627 = vmatprep.subr.mxu0 0.0
        %628 = vmatpush2.msra.mxu0 0.0
        %629 = vmatprep.subr.mxu0 0.0
        %630 = vmatpush2.msra.mxu0 0.0
        %631 = vmatprep.subr.mxu0 0.0
        %632 = vmatpush2.msra.mxu0 0.0
        %633 = vmatprep.mubr.f32.mxu0 0.0
        %634 = vmatmul.mubr.f32.gmra.mxu0 %v567
        %v635 = vpop.f32.mrf.mxu0
        %v636 = vadd.f32 0.0, %v635
        %v637 = vpop.f32.mrf.mxu0
        %v638 = vadd.f32 0.0, %v637
        %639 = vdwg.mxu0
        %v640 = vmul.f32 %v636, 0.1
        %v641 = vmul.f32 %v638, 0.1
        %v642 = vmax.f32 %v636, %v640
        %v643 = vmax.f32 %v638, %v641
        %v644 = vld [vmem:[%s3] sm:$0xff]
        %v645 = vld [vmem:[%s3 + $0x8] sm:$0xff]
        %v646 = vld [vmem:[%s3 + $0x10] sm:$0xff]
        %v647 = vld [vmem:[%s3 + $0x18] sm:$0xff]
        %vm648 = vcmask 64512
        %v650 = vsel %vm648, %v644, 0
        %v653 = vsel %vm648, %v645, 0
        %v656 = vsel %vm648, %v646, 0
        %v659 = vsel %vm648, %v647, 0
        %661 = vmatprep.subr.mxu0 0.0
        %662 = vmatpush1.msra.mxu0 0.0
        %663 = vmatprep.subr.mxu0 0.0
        %664 = vmatpush1.msra.mxu0 0.0
        %665 = vmatprep.subr.mxu0 0.0
        %666 = vmatpush1.msra.mxu0 0.0
        %667 = vmatprep.subr.mxu0 0.0
        %668 = vmatpush1.msra.mxu0 0.0
        %669 = vmatprep.subr.mxu0 0.0
        %670 = vmatpush1.msra.mxu0 0.0
        %671 = vmatprep.subr.mxu0 0.0
        %672 = vmatpush1.msra.mxu0 0.0
        %673 = vmatprep.subr.mxu0 0.0
        %674 = vmatpush1.msra.mxu0 0.0
        %675 = vmatprep.subr.mxu0 0.0
        %676 = vmatpush1.msra.mxu0 0.0
        %677 = vmatprep.subr.mxu0 0.0
        %678 = vmatpush1.msra.mxu0 0.0
        %679 = vmatprep.subr.mxu0 0.0
        %680 = vmatpush1.msra.mxu0 0.0
        %681 = vmatprep.subr.mxu0 0.0
        %682 = vmatpush1.msra.mxu0 0.0
        %683 = vmatprep.subr.mxu0 0.0
        %684 = vmatpush1.msra.mxu0 0.0
        %685 = vmatprep.subr.mxu0 0.0
        %686 = vmatpush1.msra.mxu0 0.0
        %687 = vmatprep.subr.mxu0 0.0
        %688 = vmatpush1.msra.mxu0 0.0
        %689 = vmatprep.subr.mxu0 0.0
        %690 = vmatpush1.msra.mxu0 0.0
        %691 = vmatprep.subr.mxu0 %v643
        %692 = vmatpush1.msra.mxu0 %v642
        %693 = vmatprep.subr.mxu0 0.0
        %694 = vmatpush2.msra.mxu0 0.0
        %695 = vmatprep.subr.mxu0 0.0
        %696 = vmatpush2.msra.mxu0 0.0
        %697 = vmatprep.subr.mxu0 0.0
        %698 = vmatpush2.msra.mxu0 0.0
        %699 = vmatprep.subr.mxu0 0.0
        %700 = vmatpush2.msra.mxu0 0.0
        %701 = vmatprep.subr.mxu0 0.0
        %702 = vmatpush2.msra.mxu0 0.0
        %703 = vmatprep.subr.mxu0 0.0
        %704 = vmatpush2.msra.mxu0 0.0
        %705 = vmatprep.subr.mxu0 0.0
        %706 = vmatpush2.msra.mxu0 0.0
        %707 = vmatprep.subr.mxu0 0.0
        %708 = vmatpush2.msra.mxu0 0.0
        %709 = vmatprep.subr.mxu0 0.0
        %710 = vmatpush2.msra.mxu0 0.0
        %711 = vmatprep.subr.mxu0 0.0
        %712 = vmatpush2.msra.mxu0 0.0
        %713 = vmatprep.subr.mxu0 0.0
        %714 = vmatpush2.msra.mxu0 0.0
        %715 = vmatprep.subr.mxu0 0.0
        %716 = vmatpush2.msra.mxu0 0.0
        %717 = vmatprep.subr.mxu0 0.0
        %718 = vmatpush2.msra.mxu0 0.0
        %719 = vmatprep.subr.mxu0 0.0
        %720 = vmatpush2.msra.mxu0 0.0
        %721 = vmatprep.subr.mxu0 0.0
        %722 = vmatpush2.msra.mxu0 0.0
        %723 = vmatprep.subr.mxu0 0.0
        %724 = vmatpush2.msra.mxu0 0.0
        %725 = vmatprep.mubr.f32.mxu0 0.0
        %726 = vmatmul.mubr.f32.gmra.mxu0 %v650
        %v727 = vpop.f32.mrf.mxu0
        %v728 = vadd.f32 0.0, %v727
        %v729 = vpop.f32.mrf.mxu0
        %v730 = vadd.f32 0.0, %v729
        %731 = vmatprep.mubr.f32.mxu0 0.0
        %732 = vmatmul.mubr.f32.gmra.mxu0 %v653
        %v733 = vpop.f32.mrf.mxu0
        %v734 = vadd.f32 0.0, %v733
        %v735 = vpop.f32.mrf.mxu0
        %v736 = vadd.f32 0.0, %v735
        %737 = vmatprep.mubr.f32.mxu0 0.0
        %738 = vmatmul.mubr.f32.gmra.mxu0 %v656
        %v739 = vpop.f32.mrf.mxu0
        %v740 = vadd.f32 0.0, %v739
        %v741 = vpop.f32.mrf.mxu0
        %v742 = vadd.f32 0.0, %v741
        %743 = vmatprep.mubr.f32.mxu0 0.0
        %744 = vmatmul.mubr.f32.gmra.mxu0 %v659
        %v745 = vpop.f32.mrf.mxu0
        %v746 = vadd.f32 0.0, %v745
        %v747 = vpop.f32.mrf.mxu0
        %v748 = vadd.f32 0.0, %v747
        %749 = vdwg.mxu0
        %v750 = vmul.f32 %v728, 0.1
        %v751 = vmul.f32 %v730, 0.1
        %v752 = vmul.f32 %v734, 0.1
        %v753 = vmul.f32 %v736, 0.1
        %v754 = vmul.f32 %v740, 0.1
        %v755 = vmul.f32 %v742, 0.1
        %v756 = vmul.f32 %v746, 0.1
        %v757 = vmul.f32 %v748, 0.1
        %v758 = vmax.f32 %v728, %v750
        %v759 = vmax.f32 %v730, %v751
        %v760 = vmax.f32 %v734, %v752
        %v761 = vmax.f32 %v736, %v753
        %v762 = vmax.f32 %v740, %v754
        %v763 = vmax.f32 %v742, %v755
        %v764 = vmax.f32 %v746, %v756
        %v765 = vmax.f32 %v748, %v757
        %v766 = vadd.f32 %v758, %v325
        %v767 = vadd.f32 %v759, %v327
        %v768 = vadd.f32 %v760, %v331
        %v769 = vadd.f32 %v761, %v333
        %v770 = vadd.f32 %v762, %v337
        %v771 = vadd.f32 %v763, %v339
        %v772 = vadd.f32 %v764, %v343
        %v773 = vadd.f32 %v765, %v345
        %v774 = vmul.f32 %v766, 0.1
        %v775 = vmul.f32 %v767, 0.1
        %v776 = vmul.f32 %v768, 0.1
        %v777 = vmul.f32 %v769, 0.1
        %v778 = vmul.f32 %v770, 0.1
        %v779 = vmul.f32 %v771, 0.1
        %v780 = vmul.f32 %v772, 0.1
        %v781 = vmul.f32 %v773, 0.1
        %v782 = vmax.f32 %v766, %v774
        %v783 = vmax.f32 %v767, %v775
        %v784 = vmax.f32 %v768, %v776
        %v785 = vmax.f32 %v769, %v777
        %v786 = vmax.f32 %v770, %v778
        %v787 = vmax.f32 %v771, %v779
        %v788 = vmax.f32 %v772, %v780
        %v789 = vmax.f32 %v773, %v781
        %790 = vst [vmem:[%s217] sm:$0xff] %v782
        %791 = vst [vmem:[%s217 + $0x8] sm:$0xff] %v783
        %792 = vst [vmem:[%s217 + $0x10] sm:$0xff] %v784
        %793 = vst [vmem:[%s217 + $0x18] sm:$0xff] %v785
        %794 = vst [vmem:[%s217 + $0x20] sm:$0xff] %v786
        %795 = vst [vmem:[%s217 + $0x28] sm:$0xff] %v787
        %796 = vst [vmem:[%s217 + $0x30] sm:$0xff] %v788
        %797 = vst [vmem:[%s217 + $0x38] sm:$0xff] %v789
        %s798 = sand.u32 %s137, 1
        %s799 = scalar_lea.sflag [#allocation4], %s798
        %s800 = sand.u32 %s137, 1
        %s801 = smul.addr %s800, 64
        %s802 = scalar_lea.vmem [#allocation3], %s801
        // Predicated region
        $region41: #{tpu_custom_call.1} parent=39 // pred_check
          %p803 = pneg %p147
        $region42: #{tpu_custom_call.1} parent=39 // pred_check_branch
          %805 = sbr.rel (%p803) target = $region44
        $region43: #{tpu_custom_call.1} parent=39 // pred_region
          %s807 = ssub.s32 1024, 1024
          %808 = vsyncadd %s799, %s807
          %s809 = smul.addr %s19, 8
          %s810 = smul.addr %s809, 128
          %s811 = scalar_lea.hbm %s5, %s810
          %s812 = sshll.u32 %s802, 4
          %s813 = int_to_ptr.vmem [resolvable:$true] %s812
          %818 = dma.vmem_to_hbm [thread:$0]  %s813, 1024, %s811, %s799, 256, 256, 16
        $region44: #{tpu_custom_call.1} parent=39 // pred_fallthru
          _
      $region40: #{tpu_custom_call.1} parent=5 // pred_fallthru
        _
      %p819 = scmp.le.s32.totalorder 2, %s14
      // Predicated region
      $region45: #{tpu_custom_call.1} parent=5 // pred_check
        %p820 = pneg %p819
      $region46: #{tpu_custom_call.1} parent=5 // pred_check_branch
        %822 = sbr.rel (%p820) target = $region48
      $region47: #{tpu_custom_call.1} parent=5 // pred_region
        %s823 = ssub.s32 %s14, 2
        // Predicated region
        $region49: #{tpu_custom_call.1} parent=47 // pred_check
          %p824 = pneg %p153
        $region50: #{tpu_custom_call.1} parent=47 // pred_check_branch
          %826 = sbr.rel (%p824) target = $region52
        $region51: #{tpu_custom_call.1} parent=47 // pred_region
          %s827 = sand.u32 %s138, 1
          %s828 = scalar_lea.sflag [#allocation4], %s827
          %s829 = sand.u32 %s138, 1
          %s830 = smul.addr %s829, 64
          %s831 = scalar_lea.vmem [#allocation3], %s830
          %832 = dma.done %s828, 1024
        $region52: #{tpu_custom_call.1} parent=47 // pred_fallthru
          _
      $region48: #{tpu_custom_call.1} parent=5 // pred_fallthru
        _
    $region6: #{tpu_custom_call.1} parent=1 // loop_footer
      %s18 = sadd.s32 1, %s14
    $region7: #{tpu_custom_call.1} parent=1 // loop_footer_branch
      %13 = sbr.rel target = $region3
    $region8: #{tpu_custom_call.1} parent=1 // loop_exit
      _
    %833 = vsyncpa [#allocation4], 1
    %s834 = scalar_lea.sflag [#allocation4], 1
    %835 = vsyncpa %s834, 1

</llo_original>
